<compile_context>
chip_gen: v6e
topology: v6e:2x2x1
jax: 0.10.0
libtpu: 0.0.40
codegen_flags: <defaults>
</compile_context>

<pallas_src>
import functools
import math

import jax
import jax.numpy as jnp
from jax.experimental import pallas as pl
from jax.experimental.pallas import tpu as pltpu


_CLIP_LO = 0.0005
_CLIP_HI = 0.9995


def _round_up(x, m):
    return (x + m - 1) // m * m


# --------------------------------------------------------------------------
# Pass 1: L2 normalization along `axis` (F.normalize semantics, eps = 1e-12).
# --------------------------------------------------------------------------
def _normalize_kernel(x_ref, o_ref, *, axis):
    x = x_ref[...].astype(jnp.float32)
    sumsq = jnp.sum(x * x, axis=axis, keepdims=True)
    # max(||x||, 1e-12) == sqrt(max(sumsq, 1e-24)); rsqrt + mul (EUP + VPU).
    inv = jax.lax.rsqrt(jnp.maximum(sumsq, jnp.float32(1e-24)))
    o_ref[...] = (x * inv).astype(o_ref.dtype)


def _l2_normalize(x, *, axis, tile, out_dtype):
    """Normalize a 2D array along `axis`, tiling the other axis by `tile`."""
    if axis == 1:
        n, c = x.shape
        spec = pl.BlockSpec((tile, c), lambda i: (i, 0))
        grid = (n // tile,)
    else:
        c, n = x.shape
        spec = pl.BlockSpec((c, tile), lambda i: (0, i))
        grid = (n // tile,)
    return pl.pallas_call(
        functools.partial(_normalize_kernel, axis=axis),
        out_shape=jax.ShapeDtypeStruct(x.shape, out_dtype),
        grid_spec=pltpu.PrefetchScalarGridSpec(
            num_scalar_prefetch=0,
            grid=grid,
            in_specs=[spec],
            out_specs=spec,
        ),
        compiler_params=pltpu.CompilerParams(
            dimension_semantics=("parallel",),
        ),
    )(x)


# --------------------------------------------------------------------------
# Pass 2: tiled similarity + -log(1 - sim); per-(i-tile, lane) partial sums.
# --------------------------------------------------------------------------
def _sim_min_loss_kernel(bg_ref, fgt_ref, out_ref):
    # out_ref block (1, 1, tile_j) is the accumulator for this i-tile; it is
    # resident across the (arbitrary) j axis and written back once per i.
    @pl.when(pl.program_id(1) == 0)
    def _init():
        out_ref[...] = jnp.zeros_like(out_ref)

    # Plain (tile_i, C) x (C, tile_j) matmul — fg was pre-transposed in pass 1.
    sim = jnp.dot(bg_ref[...], fgt_ref[...], preferred_element_type=jnp.float32)
    sim = jnp.clip(sim, _CLIP_LO, _CLIP_HI)
    loss = -jnp.log(1.0 - sim)
    # Sublane-direction reduce only; the single cross-lane reduce happens once,
    # in the wrapper, on the tiny partials array.
    out_ref[...] += jnp.sum(loss, axis=0, keepdims=True)[None]


def _auto_tiles(n, c, itemsize, row_gran):
    """Pick (tile_i, tile_j, n_pad). fg stays fully VMEM-resident when small."""
    fg_resident_budget = 6 * 1024 * 1024
    if n <= 2048 and n * c * itemsize <= fg_resident_budget:
        n_pad = _round_up(n, row_gran) if n <= 512 else _round_up(n, 128)
        tile_j = n_pad                      # single j tile: fg DMA'd once
    else:
        n_pad = _round_up(n, 128)
        tile_j = 256 if n_pad % 256 == 0 else 128
    if n_pad <= 1024:
        tile_i = n_pad
    else:
        # Large bg i-tile to minimize fg re-streaming (asymmetric tiles).
        tile_i = next((t for t in (512, 256, 128) if n_pad % t == 0), n_pad)
    return tile_i, tile_j, n_pad


def sim_min_loss(embedded_bg, embedded_fg, *, tile_i=None, tile_j=None,
                 mxu_in_bf16=False):
    """SimMinLoss forward: mean(-log(1 - clamp(cos_sim(bg, fg), 5e-4, 0.9995))).

    embedded_bg, embedded_fg: [N, C]. Returns a scalar f32 loss
    (reduction='mean', as in the module's default configuration).
    """
    N, C = embedded_bg.shape
    assert embedded_fg.shape == (N, C)

    in_bf16 = embedded_bg.dtype == jnp.bfloat16
    # mxu_in_bf16=True casts f32 inputs to bf16 for the MXU (numerics change;
    # only worthwhile when C is large enough to be MXU-bound).
    mxu_dtype = jnp.bfloat16 if (in_bf16 or mxu_in_bf16) else jnp.float32
    itemsize = jnp.dtype(mxu_dtype).itemsize
    row_gran = 16 if mxu_dtype == jnp.bfloat16 else 8

    if tile_i is None and tile_j is None:
        tile_i, tile_j, n_pad = _auto_tiles(N, C, itemsize, row_gran)
    else:
        assert tile_i is not None and tile_j is not None, "pass both tile_i/tile_j"
        n_pad = _round_up(N, math.lcm(tile_i, tile_j))
        assert tile_i % row_gran == 0 or tile_i == n_pad
        assert tile_j % 128 == 0 or tile_j == n_pad

    gi = n_pad // tile_i
    gj = n_pad // tile_j

    # Layout plumbing (done once, outside the O(N^2) tile loop): fg is handed
    # to the similarity kernel pre-transposed as (C, n_pad).
    bg = embedded_bg
    fg_t = embedded_fg.T
    if n_pad != N:
        bg = jnp.pad(bg, ((0, n_pad - N), (0, 0)))
        fg_t = jnp.pad(fg_t, ((0, 0), (0, n_pad - N)))

    # Pass 1: normalize once (hoisted out of the similarity tile loop).
    norm_tile = n_pad
    if n_pad * C * 4 > 4 * 1024 * 1024:
        norm_tile = next((t for t in (1024, 512, 256, 128) if n_pad % t == 0),
                         n_pad)
    bg_n = _l2_normalize(bg, axis=1, tile=norm_tile, out_dtype=mxu_dtype)
    fg_nt = _l2_normalize(fg_t, axis=0, tile=norm_tile, out_dtype=mxu_dtype)

    # Pass 2: tiled sim + loss partial sums.
    fg_streams = 1 if gj == 1 else gi       # fg re-streamed once per i sweep
    cost = pl.CostEstimate(
        flops=2 * n_pad * n_pad * C,
        transcendentals=n_pad * n_pad,      # one log per sim entry
        bytes_accessed=(n_pad * C * itemsize
                        + fg_streams * n_pad * C * itemsize
                        + gi * tile_j * 4),
    )

    # Footprint-derived VMEM cap: double-buffered inputs + f32 temporaries,
    # with 2x + 8 MiB headroom; floored at the 32 MiB default, capped at the
    # 64 MiB v7x physical budget.
    temp_bytes = 4 * tile_i * tile_j * 4
    buf_bytes = 2 * (tile_i * C + C * tile_j) * itemsize + 2 * tile_j * 4
    vmem_limit = max(32 * 1024 * 1024,
                     min(64 * 1024 * 1024,
                         2 * (temp_bytes + buf_bytes) + 8 * 1024 * 1024))

    partials = pl.pallas_call(
        _sim_min_loss_kernel,
        out_shape=jax.ShapeDtypeStruct((gi, 1, tile_j), jnp.float32),
        grid_spec=pltpu.PrefetchScalarGridSpec(
            num_scalar_prefetch=0,
            grid=(gi, gj),
            in_specs=[
                pl.BlockSpec((tile_i, C), lambda i, j: (i, 0)),
                pl.BlockSpec((C, tile_j), lambda i, j: (0, j)),
            ],
            out_specs=pl.BlockSpec((1, 1, tile_j), lambda i, j: (i, 0, 0)),
        ),
        compiler_params=pltpu.CompilerParams(
            # Output blocked per i -> i axis can use the 2nd TC on v7x.
            dimension_semantics=("parallel", "arbitrary"),
            vmem_limit_bytes=int(vmem_limit),
        ),
        cost_estimate=cost,
    )(bg_n, fg_nt)

    total = jnp.sum(partials)
    if n_pad != N:
        # Padded (zero) rows/cols give sim == 0 -> clipped to exactly 0.0005,
        # so each padded cell contributes exactly -log(1 - 0.0005).
        pad_cells = n_pad * n_pad - N * N
        pad_val = -jnp.log(jnp.float32(1.0) - jnp.float32(_CLIP_LO))
        total = total - jnp.float32(pad_cells) * pad_val
    return total / jnp.float32(N * N)


# --------------------------------------------------------------------------
# Pure-JAX reference for verification.
# --------------------------------------------------------------------------
def sim_min_loss_ref(embedded_bg, embedded_fg):
    def normalize(x):
        n = jnp.sqrt(jnp.sum(x * x, axis=1, keepdims=True))
        return x / jnp.maximum(n, 1e-12)

    bg_n = normalize(embedded_bg.astype(jnp.float32))
    fg_n = normalize(embedded_fg.astype(jnp.float32))
    sim = jnp.clip(bg_n @ fg_n.T, _CLIP_LO, _CLIP_HI)
    return jnp.mean(-jnp.log(1.0 - sim))


if __name__ == "__main__":
    key = jax.random.PRNGKey(0)
    k1, k2, k3, k4, k5, k6 = jax.random.split(key, 6)

    # Case 1: tiny aligned [N, C] (single tile, resident fg, no padding).
    N, C = 8, 32
    bg = jax.random.normal(k1, (N, C), dtype=jnp.float32)
    fg = jax.random.normal(k2, (N, C), dtype=jnp.float32)
    out = jax.block_until_ready(sim_min_loss(bg, fg))
    ref = sim_min_loss_ref(bg, fg)
    assert jnp.allclose(out, ref, rtol=1e-4, atol=1e-5), (out, ref)

    # Case 2: non-aligned N -> exercises zero-padding + analytic correction.
    N2, C2 = 20, 32
    bg2 = jax.random.normal(k3, (N2, C2), dtype=jnp.float32)
    fg2 = jax.random.normal(k4, (N2, C2), dtype=jnp.float32)
    out2 = jax.block_until_ready(sim_min_loss(bg2, fg2))
    ref2 = sim_min_loss_ref(bg2, fg2)
    assert jnp.allclose(out2, ref2, rtol=1e-4, atol=1e-5), (out2, ref2)

    # Case 3: forced multi-tile grid (gi=3, gj=3) + padding, per-i partials
    # accumulated across the j sweep with the i axis marked "parallel".
    N3, C3 = 300, 32
    bg3 = jax.random.normal(k5, (N3, C3), dtype=jnp.float32)
    fg3 = jax.random.normal(k6, (N3, C3), dtype=jnp.float32)
    out3 = jax.block_until_ready(sim_min_loss(bg3, fg3, tile_i=128, tile_j=128))
    ref3 = sim_min_loss_ref(bg3, fg3)
    assert jnp.allclose(out3, ref3, rtol=1e-4, atol=1e-5), (out3, ref3)

    print("KERNEL_OK")
</pallas_src>

<mosaic_0001>
module attributes {stable_mosaic.version = 11 : i64} {
  func.func @_normalize_kernel(%arg0: i32, %arg1: memref<8x32xf32, #tpu.memory_space<vmem>>, %arg2: memref<8x32xf32, #tpu.memory_space<vmem>>) attributes {dimension_semantics = [#tpu.dimension_semantics<parallel>], iteration_bounds = array<i64: 1>, scalar_prefetch = 0 : i64, scratch_operands = 0 : i64, tpu.core_type = #tpu.core_type<tc>, window_params = [{transform_indices = @transform_0, window_bounds = array<i64: 8, 32>}, {transform_indices = @transform_1, window_bounds = array<i64: 8, 32>}]} {
    %c0 = arith.constant 0 : index
    %c0_0 = arith.constant 0 : index
    %0 = vector.load %arg1[%c0, %c0_0] : memref<8x32xf32, #tpu.memory_space<vmem>>, vector<8x32xf32>
    %1 = arith.mulf %0, %0 : vector<8x32xf32>
    %cst = arith.constant dense<0.000000e+00> : vector<8xf32>
    %2 = vector.multi_reduction <add>, %1, %cst [1] : vector<8x32xf32> to vector<8xf32>
    %3 = vector.shape_cast %2 : vector<8xf32> to vector<8x1xf32>
    %cst_1 = arith.constant 1.000000e-24 : f32
    %4 = vector.broadcast %cst_1 : f32 to vector<8x1xf32>
    %5 = arith.maximumf %3, %4 : vector<8x1xf32>
    %6 = math.rsqrt %5 : vector<8x1xf32>
    %7 = vector.broadcast %6 : vector<8x1xf32> to vector<8x32xf32>
    %8 = arith.mulf %0, %7 : vector<8x32xf32>
    %c0_2 = arith.constant 0 : index
    %c0_3 = arith.constant 0 : index
    %9 = vector.load %arg2[%c0_2, %c0_3] : memref<8x32xf32, #tpu.memory_space<vmem>>, vector<8x32xf32>
    tpu.vector_store %arg2[%c0_2, %c0_3], %8 {strides = array<i32>} : memref<8x32xf32, #tpu.memory_space<vmem>>, vector<8x32xf32>,
    return
  }
  func.func @transform_0(%arg0: i32) -> (i32, i32) {
    %c0_i32 = arith.constant 0 : i32
    %c0_i32_0 = arith.constant 0 : i32
    return %arg0, %c0_i32 : i32, i32
  }
  func.func @transform_1(%arg0: i32) -> (i32, i32) {
    %c0_i32 = arith.constant 0 : i32
    %c0_i32_0 = arith.constant 0 : i32
    return %arg0, %c0_i32 : i32, i32
  }
}

</mosaic_0001>

<llo_original>
// kernel: tpu_custom_call.1
$region0: #{tpu_custom_call.1}
  #allocation0 [shape = 'u32[]', space=smem, size = 0x4, offset = 0x4, fixed_abs, tag = 'smem constant byte address 0x4 - core index']
  #allocation1 [shape = 'u32[144,128]{1,0:T(1,128)}', space=vmem, size = 0x12000, scoped, tag = 'internal scratch']
  %s0 = inlined_call_operand.hbm [shape: f32[8,32], index: 0, kind: input, shape index: {}]
  %s1 = inlined_call_operand.hbm [shape: f32[8,32], index: 1, kind: output, shape index: {}]
  %s2 = sld [smem:[#allocation0]]
  $region18: #{tpu_custom_call.1} parent=0
    _
  %s4 = ssub.s32 1, %s2
  %s5 = scalar_select 0, %s4, %s2
  $region1: #{tpu_custom_call.1} parent=0
    #allocation2 [shape = 'u8[4096]{0}', space=vmem, size = 0x1000, scoped, tag = 'input window, operand 0, single buffered']
    #allocation3 [shape = 's32[1]{0}', space=sflag, size = 0x4, scoped, tag = 'scoped memory for tpu_custom_call.1']
    #allocation4 [shape = 's32[1]{0}', space=sflag, size = 0x4, scoped, tag = 'scoped memory for tpu_custom_call.1']
    #allocation5 [shape = 'u8[4096]{0}', space=vmem, size = 0x1000, scoped, tag = 'output window, operand 0, single buffered']
    %6 = vsyncpa [#allocation3], 0
    %7 = vsyncpa [#allocation4], 0
    // Predicated region
    $region2: #{tpu_custom_call.1} parent=1 // pred_check
      _
    $region3: #{tpu_custom_call.1} parent=1 // pred_check_branch
      %9 = sbr.rel (0) target = $region5
    $region4: #{tpu_custom_call.1} parent=1 // pred_region
      %s11 = ssub.s32 128, 128
      %12 = vsyncadd [#allocation3], %s11
      %s14 = sshll.u32 [#allocation2], 4
      %s15 = int_to_ptr.vmem [resolvable:$true] %s14
      %17 = dma.hbm_to_vmem [thread:$0]  %s0, 128, %s15, [#allocation3]
    $region5: #{tpu_custom_call.1} parent=1 // pred_fallthru
      _
    // Predicated region
    $region6: #{tpu_custom_call.1} parent=1 // pred_check
      _
    $region7: #{tpu_custom_call.1} parent=1 // pred_check_branch
      %19 = sbr.rel (0) target = $region9
    $region8: #{tpu_custom_call.1} parent=1 // pred_region
      %20 = dma.done [#allocation3], 128
    $region9: #{tpu_custom_call.1} parent=1 // pred_fallthru
      _
    %v21 = vld [vmem:[#allocation2] sm:$0xff]
    %v22 = vmul.f32 %v21, %v21
    %vm23 = vcmask 261120
    %v24 = vsel %vm23, %v22, 0.0
    %25 = vadd.xlane.f32.xlu0 %v24
    %v26 = vpop.xlane.xlu0 %25
    %v27 = vmax.f32 %v26, 1e-24
    %v28 = vrsqrt.pop %v27
    %v29 = vmul.f32 %v21, %v28
    %30 = vst.msk [vmem:[#allocation5] sm:$0xff] %vm23, %v29
    // Predicated region
    $region10: #{tpu_custom_call.1} parent=1 // pred_check
      _
    $region11: #{tpu_custom_call.1} parent=1 // pred_check_branch
      %32 = sbr.rel (0) target = $region13
    $region12: #{tpu_custom_call.1} parent=1 // pred_region
      %s34 = ssub.s32 128, 128
      %35 = vsyncadd [#allocation4], %s34
      %s37 = sshll.u32 [#allocation5], 4
      %s38 = int_to_ptr.vmem [resolvable:$true] %s37
      %40 = dma.vmem_to_hbm [thread:$0]  %s38, 128, %s1, [#allocation4]
    $region13: #{tpu_custom_call.1} parent=1 // pred_fallthru
      _
    // Predicated region
    $region14: #{tpu_custom_call.1} parent=1 // pred_check
      _
    $region15: #{tpu_custom_call.1} parent=1 // pred_check_branch
      %42 = sbr.rel (0) target = $region17
    $region16: #{tpu_custom_call.1} parent=1 // pred_region
      %43 = dma.done [#allocation4], 128
    $region17: #{tpu_custom_call.1} parent=1 // pred_fallthru
      _
    %44 = vsyncpa [#allocation3], 1
    %45 = vsyncpa [#allocation4], 1

</llo_original>
